<compile_context>
chip_gen: v6e
topology: v6e:2x2x1
jax: 0.10.0
libtpu: 0.0.40
codegen_flags: <defaults>
</compile_context>

<pallas_src>
import jax
import jax.numpy as jnp
from jax.experimental import pallas as pl
from jax.experimental.pallas import tpu as pltpu


def _mix_proj_kernel(x_ref, w_ref, b_ref, o_ref):
    """One S-tile of: out2d[s, b*P:(b+1)*P] = x[b, s, :] @ W_mix + bias.

    x_ref : VMEM (B, TS, L*E)   streamed input slab (layer axis folded into features)
    w_ref : VMEM (L*E, P)       mix+project weight (constant index_map -> resident)
    b_ref : VMEM (1, P)         bias
    o_ref : VMEM (TS, B*P)      lane-dense output slab (already (S, B, P) layout)
    """
    B = x_ref.shape[0]
    P = w_ref.shape[1]
    w = w_ref[...]
    bias = b_ref[...]
    for b in range(B):  # B is small and static; one MXU GEMM per batch slab
        y = jnp.dot(x_ref[b], w, preferred_element_type=jnp.float32) + bias
        # lane offset b*P is a multiple of 128 -> unmasked full-lane stores
        o_ref[:, b * P:(b + 1) * P] = y.astype(o_ref.dtype)


def _mix_only_kernel(mixw_ref, x_ref, o_ref):
    """projection == -1 branch: pure VPU weighted layer sum (no MXU, no weight DMA).

    mixw_ref : SMEM (L,) f32    softmax(task_tensor) * gamma
    x_ref    : VMEM (B, TS, L*E)
    o_ref    : VMEM (TS, B*E)   lane-dense output slab
    """
    B = x_ref.shape[0]
    LE = x_ref.shape[2]
    L = mixw_ref.shape[0]
    E = LE // L
    for b in range(B):
        acc = mixw_ref[0] * x_ref[b, :, 0:E]
        for l in range(1, L):
            acc = acc + mixw_ref[l] * x_ref[b, :, l * E:(l + 1) * E]
        o_ref[:, b * E:(b + 1) * E] = acc.astype(o_ref.dtype)


def _choose_ts(S, B, LE, P_out, itemsize, *, max_ts=1024, min_steps=4):
    """S-tile: fits a generation-aware VMEM budget AND yields >= min_steps grid steps."""
    try:
        vmem_cap = pltpu.get_tpu_info().vmem_capacity_bytes
    except Exception:  # pragma: no cover - conservative fallback (v7x-sized)
        vmem_cap = 64 << 20
    budget = min(vmem_cap // 4, 24 << 20)
    per_row = 2 * B * itemsize * (LE + P_out)       # double-buffered in+out per S-row
    ts_budget = max(8, budget // per_row)
    # Guarantee multiple grid steps when S allows: keeps pipelining alive and
    # lets the "parallel" S axis shard across v7x's 2 TensorCores.
    ts_steps = max(8, ((-(-S // min_steps) + 7) // 8) * 8)
    ts = min(max_ts, ts_budget, ts_steps)
    if ts >= S:
        return S
    return max(8, (ts // 8) * 8)                    # keep sublane dim a multiple of 8


def task_fine_tune_forward(x, task_tensor, task_gamma, fc_weight=None,
                           fc_bias=None, *, max_ts=1024, min_steps=4):
    """x: (B, S, L, E). Returns (S, B, P) (or (S, B, E) if no projection), dtype of x."""
    B, S, L, E = x.shape
    LE = L * E
    dt = x.dtype                                    # keep native dtype (bf16 stays bf16)
    itemsize = jnp.dtype(dt).itemsize
    # Free contiguous reshape -- layer axis folded into features, no transpose.
    x2 = x.reshape(B, S, LE)

    # softmax over layers + gamma, computed ONCE in the wrapper (not per grid step).
    task_s = jax.nn.softmax(task_tensor.reshape(L).astype(jnp.float32))
    mixw = task_gamma.reshape(()).astype(jnp.float32) * task_s           # (L,) f32

    P_out = fc_weight.shape[0] if fc_weight is not None else E
    TS = _choose_ts(S, B, LE, P_out, itemsize, max_ts=max_ts, min_steps=min_steps)
    grid = (pl.cdiv(S, TS),)
    # Ragged last tile: rows are independent; padded input rows are dropped on
    # the masked writeback, so correctness holds.

    # Explicit VMEM budget (double-buffered streamed in/out + resident W/b).
    vmem_need = itemsize * 2 * (B * TS * LE + TS * B * P_out + LE * P_out + P_out)
    vmem_limit = int(min(max(vmem_need + (4 << 20), 16 << 20), 32 << 20))

    x_spec = pl.BlockSpec((B, TS, LE), lambda s: (0, s, 0))              # streamed
    out_spec = pl.BlockSpec((TS, B * P_out), lambda s: (s, 0))           # lane-dense
    out_shape = jax.ShapeDtypeStruct((S, B * P_out), dt)
    cparams = pltpu.CompilerParams(
        dimension_semantics=("parallel",),
        vmem_limit_bytes=vmem_limit,
    )

    if fc_weight is not None:
        # Fold layer-mix into the projection weight:
        #   W_mix[l*E + e, p] = mixw[l] * fc_weight[p, e]
        wT = jnp.transpose(fc_weight).astype(jnp.float32)                # (E, P)
        w_mix = (mixw[:, None, None] * wT[None, :, :]).reshape(LE, P_out).astype(dt)
        bias = fc_bias.reshape(1, P_out).astype(dt)
        cost = pl.CostEstimate(
            flops=2 * B * S * LE * P_out,
            transcendentals=0,
            bytes_accessed=itemsize * (B * S * LE + S * B * P_out
                                       + LE * P_out + P_out),
        )
        out2d = pl.pallas_call(
            _mix_proj_kernel,
            out_shape=out_shape,
            grid=grid,
            in_specs=[
                x_spec,
                pl.BlockSpec((LE, P_out), lambda s: (0, 0)),             # resident W
                pl.BlockSpec((1, P_out), lambda s: (0, 0)),              # resident b
            ],
            out_specs=out_spec,
            compiler_params=cparams,
            cost_estimate=cost,
        )(x2, w_mix, bias)
    else:
        # projection == -1: VPU weighted sum, mix weights live in SMEM.
        cost = pl.CostEstimate(
            flops=2 * B * S * LE,
            transcendentals=0,
            bytes_accessed=itemsize * (B * S * LE + S * B * P_out),
        )
        out2d = pl.pallas_call(
            _mix_only_kernel,
            out_shape=out_shape,
            grid=grid,
            in_specs=[
                pl.BlockSpec(memory_space=pltpu.MemorySpace.SMEM),       # mixw (L,)
                x_spec,
            ],
            out_specs=out_spec,
            compiler_params=cparams,
            cost_estimate=cost,
        )(mixw, x2)

    # Free row-major view of the same HBM bytes back to (S, B, P).
    return out2d.reshape(S, B, P_out)


def _reference(x, task_tensor, task_gamma, fc_weight, fc_bias):
    """Pure-JAX reference mirroring the PyTorch forward."""
    task_s = jax.nn.softmax(task_tensor, axis=0)                          # (L, 1)
    tv = jnp.einsum('lt,bsle->bse', task_s, x)
    tv = task_gamma[0] * tv
    if fc_weight is not None:
        tv = jnp.einsum('bse,pe->bsp', tv, fc_weight) + fc_bias
    return jnp.transpose(tv, (1, 0, 2))


if __name__ == "__main__":
    # Small shapes consistent with the module: L=3 ELMo layers, concat_dim E=128,
    # projection P=256, batch B=2, seq S=16.
    B, S, L, E, P = 2, 16, 3, 128, 256

    key = jax.random.PRNGKey(0)
    kx, kw, kb, kt = jax.random.split(key, 4)

    x = jax.random.normal(kx, (B, S, L, E), dtype=jnp.float32)

    # Parameters (deterministic, synthetic -- shapes from __init__):
    task_gamma = jnp.ones((1,), dtype=jnp.float32)                        # nn.Parameter(ones(1))
    task_tensor = jnp.ones((L, 1), dtype=jnp.float32) \
        + 0.1 * jax.random.normal(kt, (L, 1), dtype=jnp.float32)          # nn.Parameter(ones(L,1)) (+jitter)
    fc_weight = 0.02 * jax.random.normal(kw, (P, E), dtype=jnp.float32)   # nn.Linear(E, P).weight
    fc_bias = 0.02 * jax.random.normal(kb, (P,), dtype=jnp.float32)       # nn.Linear(E, P).bias

    # projection > 0 branch (min_steps=4 at S=16 -> TS=8 -> 2 grid steps,
    # exercising the tiled/pipelined path).
    out = task_fine_tune_forward(x, task_tensor, task_gamma, fc_weight, fc_bias)
    out = jax.block_until_ready(out)
    ref = _reference(x, task_tensor, task_gamma, fc_weight, fc_bias)
    assert out.shape == (S, B, P), out.shape
    assert jnp.allclose(out, ref, atol=1e-4, rtol=1e-4), \
        float(jnp.max(jnp.abs(out - ref)))

    # projection == -1 branch (no fc): dedicated VPU weighted-sum kernel.
    out2 = task_fine_tune_forward(x, task_tensor, task_gamma, None, None)
    out2 = jax.block_until_ready(out2)
    ref2 = _reference(x, task_tensor, task_gamma, None, None)
    assert out2.shape == (S, B, E), out2.shape
    assert jnp.allclose(out2, ref2, atol=1e-4, rtol=1e-4), \
        float(jnp.max(jnp.abs(out2 - ref2)))

    # bf16 input path: native dtype preserved (half the HBM stream), f32 accumulation.
    xb = x.astype(jnp.bfloat16)
    out3 = task_fine_tune_forward(xb, task_tensor, task_gamma, fc_weight, fc_bias)
    out3 = jax.block_until_ready(out3)
    ref3 = _reference(xb.astype(jnp.float32), task_tensor, task_gamma, fc_weight, fc_bias)
    assert out3.shape == (S, B, P), out3.shape
    assert out3.dtype == jnp.bfloat16, out3.dtype
    assert jnp.allclose(out3.astype(jnp.float32), ref3, atol=5e-2, rtol=5e-2), \
        float(jnp.max(jnp.abs(out3.astype(jnp.float32) - ref3)))

    print("KERNEL_OK")
</pallas_src>

<mosaic_0001>
module attributes {stable_mosaic.version = 11 : i64} {
  func.func @_mix_proj_kernel(%arg0: i32, %arg1: memref<2x8x384xf32, #tpu.memory_space<vmem>>, %arg2: memref<384x256xf32, #tpu.memory_space<vmem>>, %arg3: memref<1x256xf32, #tpu.memory_space<vmem>>, %arg4: memref<8x512xf32, #tpu.memory_space<vmem>>) attributes {dimension_semantics = [#tpu.dimension_semantics<parallel>], iteration_bounds = array<i64: 2>, scalar_prefetch = 0 : i64, scratch_operands = 0 : i64, tpu.core_type = #tpu.core_type<tc>, window_params = [{transform_indices = @transform_0, window_bounds = array<i64: 2, 8, 384>}, {pipeline_mode = #tpu.pipeline_mode<synchronous>, transform_indices = @transform_1, window_bounds = array<i64: 384, 256>}, {pipeline_mode = #tpu.pipeline_mode<synchronous>, transform_indices = @transform_2, window_bounds = array<i64: 1, 256>}, {transform_indices = @transform_3, window_bounds = array<i64: 8, 512>}]} {
    %c0 = arith.constant 0 : index
    %c0_0 = arith.constant 0 : index
    %0 = vector.load %arg2[%c0, %c0_0] : memref<384x256xf32, #tpu.memory_space<vmem>>, vector<384x256xf32>
    %c0_1 = arith.constant 0 : index
    %c0_2 = arith.constant 0 : index
    %1 = vector.load %arg3[%c0_1, %c0_2] : memref<1x256xf32, #tpu.memory_space<vmem>>, vector<1x256xf32>
    %c0_3 = arith.constant 0 : index
    %c0_4 = arith.constant 0 : index
    %c0_5 = arith.constant 0 : index
    %2 = vector.load %arg1[%c0_3, %c0_4, %c0_5] : memref<2x8x384xf32, #tpu.memory_space<vmem>>, vector<1x8x384xf32>
    %3 = vector.shape_cast %2 : vector<1x8x384xf32> to vector<8x384xf32>
    %cst = arith.constant dense<0.000000e+00> : vector<8x256xf32>
    %4 = tpu.matmul %3, %0, %cst {dimension_numbers = #tpu.dot_dimension_numbers<[1], [0], [0], [1], [0, 0, 1, 1], [], []>} : vector<8x384xf32>, vector<384x256xf32>, vector<8x256xf32> -> vector<8x256xf32>
    %5 = vector.broadcast %1 : vector<1x256xf32> to vector<8x256xf32>
    %6 = arith.addf %4, %5 : vector<8x256xf32>
    %c0_6 = arith.constant 0 : index
    %c0_7 = arith.constant 0 : index
    %7 = vector.load %arg4[%c0_6, %c0_7] : memref<8x512xf32, #tpu.memory_space<vmem>>, vector<8x256xf32>
    tpu.vector_store %arg4[%c0_6, %c0_7], %6 {strides = array<i32>} : memref<8x512xf32, #tpu.memory_space<vmem>>, vector<8x256xf32>,
    %c1 = arith.constant 1 : index
    %c0_8 = arith.constant 0 : index
    %c0_9 = arith.constant 0 : index
    %8 = vector.load %arg1[%c1, %c0_8, %c0_9] : memref<2x8x384xf32, #tpu.memory_space<vmem>>, vector<1x8x384xf32>
    %9 = vector.shape_cast %8 : vector<1x8x384xf32> to vector<8x384xf32>
    %cst_10 = arith.constant dense<0.000000e+00> : vector<8x256xf32>
    %10 = tpu.matmul %9, %0, %cst_10 {dimension_numbers = #tpu.dot_dimension_numbers<[1], [0], [0], [1], [0, 0, 1, 1], [], []>} : vector<8x384xf32>, vector<384x256xf32>, vector<8x256xf32> -> vector<8x256xf32>
    %11 = vector.broadcast %1 : vector<1x256xf32> to vector<8x256xf32>
    %12 = arith.addf %10, %11 : vector<8x256xf32>
    %c0_11 = arith.constant 0 : index
    %c256 = arith.constant 256 : index
    %13 = vector.load %arg4[%c0_11, %c256] : memref<8x512xf32, #tpu.memory_space<vmem>>, vector<8x256xf32>
    tpu.vector_store %arg4[%c0_11, %c256], %12 {strides = array<i32>} : memref<8x512xf32, #tpu.memory_space<vmem>>, vector<8x256xf32>,
    return
  }
  func.func @transform_0(%arg0: i32) -> (i32, i32, i32) {
    %c0_i32 = arith.constant 0 : i32
    %c0_i32_0 = arith.constant 0 : i32
    %c0_i32_1 = arith.constant 0 : i32
    return %c0_i32, %arg0, %c0_i32_0 : i32, i32, i32
  }
  func.func @transform_1(%arg0: i32) -> (i32, i32) {
    %c0_i32 = arith.constant 0 : i32
    %c0_i32_0 = arith.constant 0 : i32
    %c0_i32_1 = arith.constant 0 : i32
    return %c0_i32, %c0_i32_0 : i32, i32
  }
  func.func @transform_2(%arg0: i32) -> (i32, i32) {
    %c0_i32 = arith.constant 0 : i32
    %c0_i32_0 = arith.constant 0 : i32
    %c0_i32_1 = arith.constant 0 : i32
    return %c0_i32, %c0_i32_0 : i32, i32
  }
  func.func @transform_3(%arg0: i32) -> (i32, i32) {
    %c0_i32 = arith.constant 0 : i32
    %c0_i32_0 = arith.constant 0 : i32
    return %arg0, %c0_i32 : i32, i32
  }
}

</mosaic_0001>

<llo_original>
// kernel: tpu_custom_call.1
$region0: #{tpu_custom_call.1}
  #allocation0 [shape = 'u32[]', space=smem, size = 0x4, offset = 0x4, fixed_abs, tag = 'smem constant byte address 0x4 - core index']
  #allocation1 [shape = 'u32[144,128]{1,0:T(1,128)}', space=vmem, size = 0x12000, scoped, tag = 'internal scratch']
  %s0 = inlined_call_operand.hbm [shape: f32[2,16,384], index: 0, kind: input, shape index: {}]
  %s1 = inlined_call_operand.hbm [shape: f32[384,256], index: 1, kind: input, shape index: {}]
  %s2 = inlined_call_operand.vmem [shape: f32[1,256], index: 2, kind: input, shape index: {}]
  %s3 = inlined_call_operand.hbm [shape: f32[16,512], index: 3, kind: output, shape index: {}]
  %s4 = sld [smem:[#allocation0]]
  $region53: #{tpu_custom_call.1} parent=0
    _
  %s6 = ssub.s32 1, %s4
  %s7 = scalar_select 0, %s6, %s4
  $region1: #{tpu_custom_call.1} parent=0
    #allocation2 [shape = 'u8[49152]{0}', space=vmem, size = 0xc000, scoped, tag = 'input window, operand 0']
    #allocation3 [shape = 's32[2]{0}', space=sflag, size = 0x8, scoped, tag = 'scoped memory for tpu_custom_call.1']
    #allocation4 [shape = 's32[2]{0}', space=sflag, size = 0x8, scoped, tag = 'scoped memory for tpu_custom_call.1']
    #allocation5 [shape = 'u8[393216]{0}', space=vmem, size = 0x60000, scoped, tag = 'input window, operand 1, single buffered']
    #allocation6 [shape = 's32[1]{0}', space=sflag, size = 0x4, scoped, tag = 'scoped memory for tpu_custom_call.1']
    #allocation7 [shape = 'u8[32768]{0}', space=vmem, size = 0x8000, scoped, tag = 'output window, operand 0']
    %8 = vsyncpa [#allocation3], 0
    %s9 = scalar_lea.sflag [#allocation3], 1
    %10 = vsyncpa %s9, 0
    %11 = vsyncpa [#allocation6], 0
    %12 = vsyncpa [#allocation4], 0
    %s13 = scalar_lea.sflag [#allocation4], 1
    %14 = vsyncpa %s13, 0
    loop: start=0, step=1, limit=4
    $region2: #{tpu_custom_call.1} parent=1 // loop_pre_header
      _
    $region3: #{tpu_custom_call.1} parent=1 // loop_header
      %s16 = sphi 0, %s20
      %p17 = scmp.ge.s32.totalorder %s16, 4
      %s26 = sphi 0, %s28
      %s29 = sphi 0, %s26
      %s30 = sphi 0, %s29
      %s46 = sphi 0, %s30
      %s50 = sphi 0, %s50
      %s52 = sphi 0, %s50
      %s53 = sphi 0, %s52
      %s67 = sphi 0, %s53
      %s71 = sphi 0, %s71
      %s73 = sphi 0, %s71
      %s74 = sphi 0, %s73
      %s88 = sphi 0, %s74
      %s94 = sphi 0, %s96
      %s97 = sphi 0, %s94
      %s98 = sphi 0, %s97
      %s114 = sphi 0, %s98
    $region4: #{tpu_custom_call.1} parent=1 // loop_header_branch
      %19 = sbr.rel (%p17) target = $region8
    $region5: #{tpu_custom_call.1} parent=1 // loop_body
      %s21 = ssub.s32 %s16, 1
      %s22 = ssub.s32 %s16, 2
      %s23 = sadd.s32 %s16, 1
      %s24 = ssub.s32 %s16, %s23
      %p25 = scmp.eq.s32.totalorder %s24, 0
      %s27 = sadd.s32 %s26, 1
      %s28 = scalar_select %p25, %s26, %s27
      %p31 = pneg %p25
      %p32 = scmp.eq.s32.totalorder %s16, 1
      %p33 = por %p31, %p32
      %p34 = scmp.ne.s32.totalorder %s26, %s29
      %p35 = scmp.eq.s32.totalorder %s16, 0
      %p36 = por %p34, %p35
      %p37 = scmp.ne.s32.totalorder %s26, %s29
      %p38 = scmp.eq.s32.totalorder %s21, 1
      %p39 = por %p37, %p38
      %p40 = scmp.ne.s32.totalorder %s29, %s30
      %p41 = scmp.eq.s32.totalorder %s21, 0
      %p42 = por %p40, %p41
      %p43 = scmp.ne.s32.totalorder %s29, %s30
      %p44 = scmp.eq.s32.totalorder %s22, 1
      %p45 = por %p43, %p44
      %p47 = scmp.ne.s32.totalorder %s30, %s46
      %p48 = scmp.eq.s32.totalorder %s22, 0
      %p49 = por %p47, %p48
      %s51 = sadd.s32 %s50, 1
      %p54 = scmp.eq.s32.totalorder %s16, 1
      %p55 = scmp.ne.s32.totalorder %s50, %s52
      %p56 = scmp.eq.s32.totalorder %s16, 0
      %p57 = por %p55, %p56
      %p58 = scmp.ne.s32.totalorder %s50, %s52
      %p59 = scmp.eq.s32.totalorder %s21, 1
      %p60 = por %p58, %p59
      %p61 = scmp.ne.s32.totalorder %s52, %s53
      %p62 = scmp.eq.s32.totalorder %s21, 0
      %p63 = por %p61, %p62
      %p64 = scmp.ne.s32.totalorder %s52, %s53
      %p65 = scmp.eq.s32.totalorder %s22, 1
      %p66 = por %p64, %p65
      %p68 = scmp.ne.s32.totalorder %s53, %s67
      %p69 = scmp.eq.s32.totalorder %s22, 0
      %p70 = por %p68, %p69
      %s72 = sadd.s32 %s71, 1
      %p75 = scmp.eq.s32.totalorder %s16, 1
      %p76 = scmp.ne.s32.totalorder %s71, %s73
      %p77 = scmp.eq.s32.totalorder %s16, 0
      %p78 = por %p76, %p77
      %p79 = scmp.ne.s32.totalorder %s71, %s73
      %p80 = scmp.eq.s32.totalorder %s21, 1
      %p81 = por %p79, %p80
      %p82 = scmp.ne.s32.totalorder %s73, %s74
      %p83 = scmp.eq.s32.totalorder %s21, 0
      %p84 = por %p82, %p83
      %p85 = scmp.ne.s32.totalorder %s73, %s74
      %p86 = scmp.eq.s32.totalorder %s22, 1
      %p87 = por %p85, %p86
      %p89 = scmp.ne.s32.totalorder %s74, %s88
      %p90 = scmp.eq.s32.totalorder %s22, 0
      %p91 = por %p89, %p90
      %s92 = ssub.s32 %s16, %s23
      %p93 = scmp.eq.s32.totalorder %s92, 0
      %s95 = sadd.s32 %s94, 1
      %s96 = scalar_select %p93, %s94, %s95
      %p99 = pneg %p93
      %p100 = scmp.eq.s32.totalorder %s16, 1
      %p101 = por %p99, %p100
      %p102 = scmp.ne.s32.totalorder %s94, %s97
      %p103 = scmp.eq.s32.totalorder %s16, 0
      %p104 = por %p102, %p103
      %p105 = scmp.ne.s32.totalorder %s94, %s97
      %p106 = scmp.eq.s32.totalorder %s21, 1
      %p107 = por %p105, %p106
      %p108 = scmp.ne.s32.totalorder %s97, %s98
      %p109 = scmp.eq.s32.totalorder %s21, 0
      %p110 = por %p108, %p109
      %p111 = scmp.ne.s32.totalorder %s97, %s98
      %p112 = scmp.eq.s32.totalorder %s22, 1
      %p113 = por %p111, %p112
      %p115 = scmp.ne.s32.totalorder %s98, %s114
      %p116 = scmp.eq.s32.totalorder %s22, 0
      %p117 = por %p115, %p116
      %p118 = scmp.le.s32.totalorder 1, %s16
      %p119 = scmp.lt.s32.totalorder %s16, 3
      %p120 = pnand %p118, %p119
      %p121 = pneg %p120
      // Predicated region
      $region9: #{tpu_custom_call.1} parent=5 // pred_check
        _
      $region10: #{tpu_custom_call.1} parent=5 // pred_check_branch
        %123 = sbr.rel (%p120) target = $region12
      $region11: #{tpu_custom_call.1} parent=5 // pred_region
        %s124 = ssub.s32 %s16, 1
        // Predicated region
        $region13: #{tpu_custom_call.1} parent=11 // pred_check
          %p125 = pneg %p63
        $region14: #{tpu_custom_call.1} parent=11 // pred_check_branch
          %127 = sbr.rel (%p125) target = $region16
        $region15: #{tpu_custom_call.1} parent=11 // pred_region
          %s129 = ssub.s32 12288, 12288
          %130 = vsyncadd [#allocation6], %s129
          %s131 = sshll.u32 [#allocation5], 4
          %s132 = int_to_ptr.vmem [resolvable:$true] %s131
          %137 = dma.hbm_to_vmem [thread:$0]  %s1, 12288, %s132, [#allocation6], 256, 256, 16
        $region16: #{tpu_custom_call.1} parent=11 // pred_fallthru
          _
        // Predicated region
        $region17: #{tpu_custom_call.1} parent=11 // pred_check
          %p138 = pneg %p84
        $region18: #{tpu_custom_call.1} parent=11 // pred_check_branch
          %140 = sbr.rel (%p138) target = $region20
        $region19: #{tpu_custom_call.1} parent=11 // pred_region
          _
        $region20: #{tpu_custom_call.1} parent=11 // pred_fallthru
          _
      $region12: #{tpu_custom_call.1} parent=5 // pred_fallthru
        _
      %p141 = scmp.lt.s32.totalorder %s16, 2
      // Predicated region
      $region21: #{tpu_custom_call.1} parent=5 // pred_check
        %p142 = pneg %p141
      $region22: #{tpu_custom_call.1} parent=5 // pred_check_branch
        %144 = sbr.rel (%p142) target = $region24
      $region23: #{tpu_custom_call.1} parent=5 // pred_region
        // Predicated region
        $region25: #{tpu_custom_call.1} parent=23 // pred_check
          %p145 = pneg %p36
        $region26: #{tpu_custom_call.1} parent=23 // pred_check_branch
          %147 = sbr.rel (%p145) target = $region28
        $region27: #{tpu_custom_call.1} parent=23 // pred_region
          %s148 = sand.u32 %s26, 1
          %s149 = scalar_lea.sflag [#allocation3], %s148
          %s150 = sand.u32 %s26, 1
          %s151 = smul.addr %s150, 48
          %s152 = scalar_lea.vmem [#allocation2], %s151
          %s154 = ssub.s32 768, 768
          %155 = vsyncadd %s149, %s154
          %s156 = smul.addr %s16, 3
          %s157 = smul.addr %s156, 128
          %s158 = scalar_lea.hbm %s0, %s157
          %s159 = sshll.u32 %s152, 4
          %s160 = int_to_ptr.vmem [resolvable:$true] %s159
          %165 = dma.hbm_to_vmem [thread:$0]  %s158, 768, %s160, %s149, 768, 384, 24
        $region28: #{tpu_custom_call.1} parent=23 // pred_fallthru
          _
      $region24: #{tpu_custom_call.1} parent=5 // pred_fallthru
        _
      %p166 = scmp.le.s32.totalorder 1, %s16
      %p167 = scmp.lt.s32.totalorder %s16, 3
      %p168 = pnand %p166, %p167
      %p169 = pneg %p168
      // Predicated region
      $region29: #{tpu_custom_call.1} parent=5 // pred_check
        _
      $region30: #{tpu_custom_call.1} parent=5 // pred_check_branch
        %171 = sbr.rel (%p168) target = $region32
      $region31: #{tpu_custom_call.1} parent=5 // pred_region
        %s172 = ssub.s32 %s16, 1
        %s173 = sand.u32 %s29, 1
        %s174 = scalar_lea.sflag [#allocation3], %s173
        %s175 = sand.u32 %s29, 1
        %s176 = smul.addr %s175, 48
        %s177 = scalar_lea.vmem [#allocation2], %s176
        // Predicated region
        $region33: #{tpu_custom_call.1} parent=31 // pred_check
          %p178 = pneg %p42
        $region34: #{tpu_custom_call.1} parent=31 // pred_check_branch
          %180 = sbr.rel (%p178) target = $region36
        $region35: #{tpu_custom_call.1} parent=31 // pred_region
          %181 = dma.done %s174, 768
        $region36: #{tpu_custom_call.1} parent=31 // pred_fallthru
          _
        // Predicated region
        $region37: #{tpu_custom_call.1} parent=31 // pred_check
          %p182 = pneg %p63
        $region38: #{tpu_custom_call.1} parent=31 // pred_check_branch
          %184 = sbr.rel (%p182) target = $region40
        $region39: #{tpu_custom_call.1} parent=31 // pred_region
          %185 = dma.done [#allocation6], 12288
        $region40: #{tpu_custom_call.1} parent=31 // pred_fallthru
          _
        %s186 = sand.u32 %s29, 1
        %s187 = scalar_lea.sflag [#allocation3], %s186
        %s188 = sand.u32 %s29, 1
        %s189 = smul.addr %s188, 48
        %s190 = scalar_lea.vmem [#allocation2], %s189
        %p191 = pneg %p42
        %p192 = pneg %p39
        %p193 = pneg %p63
        %p194 = pneg %p60
        %p195 = pneg %p84
        %p196 = pneg %p81
        %p197 = pneg %p110
        %p198 = pneg %p107
        %s199 = sand.u32 %s97, 1
        %s200 = scalar_lea.sflag [#allocation4], %s199
        %s201 = sand.u32 %s97, 1
        %s202 = smul.addr %s201, 32
        %s203 = scalar_lea.vmem [#allocation7], %s202
        %v204 = vld [vmem:[#allocation5] sm:$0xff]
        %v205 = vld [vmem:[#allocation5 + $0x8] sm:$0xff]
        %v206 = vld [vmem:[#allocation5 + $0x10] sm:$0xff]
        %v207 = vld [vmem:[#allocation5 + $0x18] sm:$0xff]
        %v208 = vld [vmem:[#allocation5 + $0x20] sm:$0xff]
        %v209 = vld [vmem:[#allocation5 + $0x28] sm:$0xff]
        %v210 = vld [vmem:[#allocation5 + $0x30] sm:$0xff]
        %v211 = vld [vmem:[#allocation5 + $0x38] sm:$0xff]
        %v212 = vld [vmem:[#allocation5 + $0x40] sm:$0xff]
        %v213 = vld [vmem:[#allocation5 + $0x48] sm:$0xff]
        %v214 = vld [vmem:[#allocation5 + $0x50] sm:$0xff]
        %v215 = vld [vmem:[#allocation5 + $0x58] sm:$0xff]
        %v216 = vld [vmem:[#allocation5 + $0x60] sm:$0xff]
        %v217 = vld [vmem:[#allocation5 + $0x68] sm:$0xff]
        %v218 = vld [vmem:[#allocation5 + $0x70] sm:$0xff]
        %v219 = vld [vmem:[#allocation5 + $0x78] sm:$0xff]
        %v220 = vld [vmem:[#allocation5 + $0x80] sm:$0xff]
        %v221 = vld [vmem:[#allocation5 + $0x88] sm:$0xff]
        %v222 = vld [vmem:[#allocation5 + $0x90] sm:$0xff]
        %v223 = vld [vmem:[#allocation5 + $0x98] sm:$0xff]
        %v224 = vld [vmem:[#allocation5 + $0xa0] sm:$0xff]
        %v225 = vld [vmem:[#allocation5 + $0xa8] sm:$0xff]
        %v226 = vld [vmem:[#allocation5 + $0xb0] sm:$0xff]
        %v227 = vld [vmem:[#allocation5 + $0xb8] sm:$0xff]
        %v228 = vld [vmem:[#allocation5 + $0xc0] sm:$0xff]
        %v229 = vld [vmem:[#allocation5 + $0xc8] sm:$0xff]
        %v230 = vld [vmem:[#allocation5 + $0xd0] sm:$0xff]
        %v231 = vld [vmem:[#allocation5 + $0xd8] sm:$0xff]
        %v232 = vld [vmem:[#allocation5 + $0xe0] sm:$0xff]
        %v233 = vld [vmem:[#allocation5 + $0xe8] sm:$0xff]
        %v234 = vld [vmem:[#allocation5 + $0xf0] sm:$0xff]
        %v235 = vld [vmem:[#allocation5 + $0xf8] sm:$0xff]
        %v236 = vld [vmem:[#allocation5 + $0x100] sm:$0xff]
        %v237 = vld [vmem:[#allocation5 + $0x108] sm:$0xff]
        %v238 = vld [vmem:[#allocation5 + $0x110] sm:$0xff]
        %v239 = vld [vmem:[#allocation5 + $0x118] sm:$0xff]
        %v240 = vld [vmem:[#allocation5 + $0x120] sm:$0xff]
        %v241 = vld [vmem:[#allocation5 + $0x128] sm:$0xff]
        %v242 = vld [vmem:[#allocation5 + $0x130] sm:$0xff]
        %v243 = vld [vmem:[#allocation5 + $0x138] sm:$0xff]
        %v244 = vld [vmem:[#allocation5 + $0x140] sm:$0xff]
        %v245 = vld [vmem:[#allocation5 + $0x148] sm:$0xff]
        %v246 = vld [vmem:[#allocation5 + $0x150] sm:$0xff]
        %v247 = vld [vmem:[#allocation5 + $0x158] sm:$0xff]
        %v248 = vld [vmem:[#allocation5 + $0x160] sm:$0xff]
        %v249 = vld [vmem:[#allocation5 + $0x168] sm:$0xff]
        %v250 = vld [vmem:[#allocation5 + $0x170] sm:$0xff]
        %v251 = vld [vmem:[#allocation5 + $0x178] sm:$0xff]
        %v252 = vld [vmem:[#allocation5 + $0x180] sm:$0xff]
        %v253 = vld [vmem:[#allocation5 + $0x188] sm:$0xff]
        %v254 = vld [vmem:[#allocation5 + $0x190] sm:$0xff]
        %v255 = vld [vmem:[#allocation5 + $0x198] sm:$0xff]
        %v256 = vld [vmem:[#allocation5 + $0x1a0] sm:$0xff]
        %v257 = vld [vmem:[#allocation5 + $0x1a8] sm:$0xff]
        %v258 = vld [vmem:[#allocation5 + $0x1b0] sm:$0xff]
        %v259 = vld [vmem:[#allocation5 + $0x1b8] sm:$0xff]
        %v260 = vld [vmem:[#allocation5 + $0x1c0] sm:$0xff]
        %v261 = vld [vmem:[#allocation5 + $0x1c8] sm:$0xff]
        %v262 = vld [vmem:[#allocation5 + $0x1d0] sm:$0xff]
        %v263 = vld [vmem:[#allocation5 + $0x1d8] sm:$0xff]
        %v264 = vld [vmem:[#allocation5 + $0x1e0] sm:$0xff]
        %v265 = vld [vmem:[#allocation5 + $0x1e8] sm:$0xff]
        %v266 = vld [vmem:[#allocation5 + $0x1f0] sm:$0xff]
        %v267 = vld [vmem:[#allocation5 + $0x1f8] sm:$0xff]
        %v268 = vld [vmem:[#allocation5 + $0x200] sm:$0xff]
        %v269 = vld [vmem:[#allocation5 + $0x208] sm:$0xff]
        %v270 = vld [vmem:[#allocation5 + $0x210] sm:$0xff]
        %v271 = vld [vmem:[#allocation5 + $0x218] sm:$0xff]
        %v272 = vld [vmem:[#allocation5 + $0x220] sm:$0xff]
        %v273 = vld [vmem:[#allocation5 + $0x228] sm:$0xff]
        %v274 = vld [vmem:[#allocation5 + $0x230] sm:$0xff]
        %v275 = vld [vmem:[#allocation5 + $0x238] sm:$0xff]
        %v276 = vld [vmem:[#allocation5 + $0x240] sm:$0xff]
        %v277 = vld [vmem:[#allocation5 + $0x248] sm:$0xff]
        %v278 = vld [vmem:[#allocation5 + $0x250] sm:$0xff]
        %v279 = vld [vmem:[#allocation5 + $0x258] sm:$0xff]
        %v280 = vld [vmem:[#allocation5 + $0x260] sm:$0xff]
        %v281 = vld [vmem:[#allocation5 + $0x268] sm:$0xff]
        %v282 = vld [vmem:[#allocation5 + $0x270] sm:$0xff]
        %v283 = vld [vmem:[#allocation5 + $0x278] sm:$0xff]
        %v284 = vld [vmem:[#allocation5 + $0x280] sm:$0xff]
        %v285 = vld [vmem:[#allocation5 + $0x288] sm:$0xff]
        %v286 = vld [vmem:[#allocation5 + $0x290] sm:$0xff]
        %v287 = vld [vmem:[#allocation5 + $0x298] sm:$0xff]
        %v288 = vld [vmem:[#allocation5 + $0x2a0] sm:$0xff]
        %v289 = vld [vmem:[#allocation5 + $0x2a8] sm:$0xff]
        %v290 = vld [vmem:[#allocation5 + $0x2b0] sm:$0xff]
        %v291 = vld [vmem:[#allocation5 + $0x2b8] sm:$0xff]
        %v292 = vld [vmem:[#allocation5 + $0x2c0] sm:$0xff]
        %v293 = vld [vmem:[#allocation5 + $0x2c8] sm:$0xff]
        %v294 = vld [vmem:[#allocation5 + $0x2d0] sm:$0xff]
        %v295 = vld [vmem:[#allocation5 + $0x2d8] sm:$0xff]
        %v296 = vld [vmem:[#allocation5 + $0x2e0] sm:$0xff]
        %v297 = vld [vmem:[#allocation5 + $0x2e8] sm:$0xff]
        %v298 = vld [vmem:[#allocation5 + $0x2f0] sm:$0xff]
        %v299 = vld [vmem:[#allocation5 + $0x2f8] sm:$0xff]
        %v300 = vld [vmem:[%s2] sm:$0x3]
        %v301 = vld [vmem:[%s177] sm:$0xff]
        %v302 = vld [vmem:[%s177 + $0x8] sm:$0xff]
        %v303 = vld [vmem:[%s177 + $0x10] sm:$0xff]
        %v305 = vlaneseq
        %v306 = vshrl.u32 %v305, 7
        %v307 = vsub.s32 0, %v306
        %v308 = vrot.slane %v300, %v307
        %v309 = vlaneseq
        %v310 = vshrl.u32 %v309, 7
        %v311 = vsub.s32 1, %v310
        %v312 = vrot.slane %v300, %v311
        %315 = vmatprep.subr.mxu0 %v235
        %316 = vmatpush1.msra.mxu0 %v234
        %317 = vmatprep.subr.mxu0 %v233
        %318 = vmatpush1.msra.mxu0 %v232
        %319 = vmatprep.subr.mxu0 %v231
        %320 = vmatpush1.msra.mxu0 %v230
        %321 = vmatprep.subr.mxu0 %v229
        %322 = vmatpush1.msra.mxu0 %v228
        %323 = vmatprep.subr.mxu0 %v227
        %324 = vmatpush1.msra.mxu0 %v226
        %325 = vmatprep.subr.mxu0 %v225
        %326 = vmatpush1.msra.mxu0 %v224
        %327 = vmatprep.subr.mxu0 %v223
        %328 = vmatpush1.msra.mxu0 %v222
        %329 = vmatprep.subr.mxu0 %v221
        %330 = vmatpush1.msra.mxu0 %v220
        %331 = vmatprep.subr.mxu0 %v219
        %332 = vmatpush1.msra.mxu0 %v218
        %333 = vmatprep.subr.mxu0 %v217
        %334 = vmatpush1.msra.mxu0 %v216
        %335 = vmatprep.subr.mxu0 %v215
        %336 = vmatpush1.msra.mxu0 %v214
        %337 = vmatprep.subr.mxu0 %v213
        %338 = vmatpush1.msra.mxu0 %v212
        %339 = vmatprep.subr.mxu0 %v211
        %340 = vmatpush1.msra.mxu0 %v210
        %341 = vmatprep.subr.mxu0 %v209
        %342 = vmatpush1.msra.mxu0 %v208
        %343 = vmatprep.subr.mxu0 %v207
        %344 = vmatpush1.msra.mxu0 %v206
        %345 = vmatprep.subr.mxu0 %v205
        %346 = vmatpush1.msra.mxu0 %v204
        %347 = vmatprep.subr.mxu0 %v267
        %348 = vmatpush2.msra.mxu0 %v266
        %349 = vmatprep.subr.mxu0 %v265
        %350 = vmatpush2.msra.mxu0 %v264
        %351 = vmatprep.subr.mxu0 %v263
        %352 = vmatpush2.msra.mxu0 %v262
        %353 = vmatprep.subr.mxu0 %v261
        %354 = vmatpush2.msra.mxu0 %v260
        %355 = vmatprep.subr.mxu0 %v259
        %356 = vmatpush2.msra.mxu0 %v258
        %357 = vmatprep.subr.mxu0 %v257
        %358 = vmatpush2.msra.mxu0 %v256
        %359 = vmatprep.subr.mxu0 %v255
        %360 = vmatpush2.msra.mxu0 %v254
        %361 = vmatprep.subr.mxu0 %v253
        %362 = vmatpush2.msra.mxu0 %v252
        %363 = vmatprep.subr.mxu0 %v251
        %364 = vmatpush2.msra.mxu0 %v250
        %365 = vmatprep.subr.mxu0 %v249
        %366 = vmatpush2.msra.mxu0 %v248
        %367 = vmatprep.subr.mxu0 %v247
        %368 = vmatpush2.msra.mxu0 %v246
        %369 = vmatprep.subr.mxu0 %v245
        %370 = vmatpush2.msra.mxu0 %v244
        %371 = vmatprep.subr.mxu0 %v243
        %372 = vmatpush2.msra.mxu0 %v242
        %373 = vmatprep.subr.mxu0 %v241
        %374 = vmatpush2.msra.mxu0 %v240
        %375 = vmatprep.subr.mxu0 %v239
        %376 = vmatpush2.msra.mxu0 %v238
        %377 = vmatprep.subr.mxu0 %v237
        %378 = vmatpush2.msra.mxu0 %v236
        %379 = vmatprep.mubr.f32.mxu0 %v302
        %380 = vmatmul.mubr.f32.gmra.mxu0 %v301
        %v381 = vpop.f32.mrf.mxu0
        %v382 = vadd.f32 %v308, %v381
        %v383 = vpop.f32.mrf.mxu0
        %v384 = vadd.f32 %v312, %v383
        %385 = vdwg.mxu0
        %386 = vmatprep.subr.mxu0 %v299
        %387 = vmatpush1.msra.mxu0 %v298
        %388 = vmatprep.subr.mxu0 %v297
        %389 = vmatpush1.msra.mxu0 %v296
        %390 = vmatprep.subr.mxu0 %v295
        %391 = vmatpush1.msra.mxu0 %v294
        %392 = vmatprep.subr.mxu0 %v293
        %393 = vmatpush1.msra.mxu0 %v292
        %394 = vmatprep.subr.mxu0 %v291
        %395 = vmatpush1.msra.mxu0 %v290
        %396 = vmatprep.subr.mxu0 %v289
        %397 = vmatpush1.msra.mxu0 %v288
        %398 = vmatprep.subr.mxu0 %v287
        %399 = vmatpush1.msra.mxu0 %v286
        %400 = vmatprep.subr.mxu0 %v285
        %401 = vmatpush1.msra.mxu0 %v284
        %402 = vmatprep.subr.mxu0 %v283
        %403 = vmatpush1.msra.mxu0 %v282
        %404 = vmatprep.subr.mxu0 %v281
        %405 = vmatpush1.msra.mxu0 %v280
        %406 = vmatprep.subr.mxu0 %v279
        %407 = vmatpush1.msra.mxu0 %v278
        %408 = vmatprep.subr.mxu0 %v277
        %409 = vmatpush1.msra.mxu0 %v276
        %410 = vmatprep.subr.mxu0 %v275
        %411 = vmatpush1.msra.mxu0 %v274
        %412 = vmatprep.subr.mxu0 %v273
        %413 = vmatpush1.msra.mxu0 %v272
        %414 = vmatprep.subr.mxu0 %v271
        %415 = vmatpush1.msra.mxu0 %v270
        %416 = vmatprep.subr.mxu0 %v269
        %417 = vmatpush1.msra.mxu0 %v268
        %418 = vmatprep.subr.mxu0 0.0
        %419 = vmatpush2.msra.mxu0 0.0
        %420 = vmatprep.subr.mxu0 0.0
        %421 = vmatpush2.msra.mxu0 0.0
        %422 = vmatprep.subr.mxu0 0.0
        %423 = vmatpush2.msra.mxu0 0.0
        %424 = vmatprep.subr.mxu0 0.0
        %425 = vmatpush2.msra.mxu0 0.0
        %426 = vmatprep.subr.mxu0 0.0
        %427 = vmatpush2.msra.mxu0 0.0
        %428 = vmatprep.subr.mxu0 0.0
        %429 = vmatpush2.msra.mxu0 0.0
        %430 = vmatprep.subr.mxu0 0.0
        %431 = vmatpush2.msra.mxu0 0.0
        %432 = vmatprep.subr.mxu0 0.0
        %433 = vmatpush2.msra.mxu0 0.0
        %434 = vmatprep.subr.mxu0 0.0
        %435 = vmatpush2.msra.mxu0 0.0
        %436 = vmatprep.subr.mxu0 0.0
        %437 = vmatpush2.msra.mxu0 0.0
        %438 = vmatprep.subr.mxu0 0.0
        %439 = vmatpush2.msra.mxu0 0.0
        %440 = vmatprep.subr.mxu0 0.0
        %441 = vmatpush2.msra.mxu0 0.0
        %442 = vmatprep.subr.mxu0 0.0
        %443 = vmatpush2.msra.mxu0 0.0
        %444 = vmatprep.subr.mxu0 0.0
        %445 = vmatpush2.msra.mxu0 0.0
        %446 = vmatprep.subr.mxu0 0.0
        %447 = vmatpush2.msra.mxu0 0.0
        %448 = vmatprep.subr.mxu0 0.0
        %449 = vmatpush2.msra.mxu0 0.0
        %450 = vmatprep.mubr.f32.mxu0 0.0
        %451 = vmatmul.mubr.f32.gmra.mxu0 %v303
        %v452 = vpop.f32.mrf.mxu0
        %v453 = vadd.f32 %v382, %v452
        %v454 = vpop.f32.mrf.mxu0
        %v455 = vadd.f32 %v384, %v454
        %456 = vdwg.mxu0
        %457 = vst [vmem:[%s203] sm:$0xff] %v453
        %458 = vst [vmem:[%s203 + $0x8] sm:$0xff] %v455
        %s459 = scalar_lea.vmem %s177, 24 [#allocation2]
        %v460 = vld [vmem:[%s459] sm:$0xff]
        %v461 = vld [vmem:[%s459 + $0x8] sm:$0xff]
        %v462 = vld [vmem:[%s459 + $0x10] sm:$0xff]
        %463 = vmatprep.subr.mxu0 %v235
        %464 = vmatpush1.msra.mxu0 %v234
        %465 = vmatprep.subr.mxu0 %v233
        %466 = vmatpush1.msra.mxu0 %v232
        %467 = vmatprep.subr.mxu0 %v231
        %468 = vmatpush1.msra.mxu0 %v230
        %469 = vmatprep.subr.mxu0 %v229
        %470 = vmatpush1.msra.mxu0 %v228
        %471 = vmatprep.subr.mxu0 %v227
        %472 = vmatpush1.msra.mxu0 %v226
        %473 = vmatprep.subr.mxu0 %v225
        %474 = vmatpush1.msra.mxu0 %v224
        %475 = vmatprep.subr.mxu0 %v223
        %476 = vmatpush1.msra.mxu0 %v222
        %477 = vmatprep.subr.mxu0 %v221
        %478 = vmatpush1.msra.mxu0 %v220
        %479 = vmatprep.subr.mxu0 %v219
        %480 = vmatpush1.msra.mxu0 %v218
        %481 = vmatprep.subr.mxu0 %v217
        %482 = vmatpush1.msra.mxu0 %v216
        %483 = vmatprep.subr.mxu0 %v215
        %484 = vmatpush1.msra.mxu0 %v214
        %485 = vmatprep.subr.mxu0 %v213
        %486 = vmatpush1.msra.mxu0 %v212
        %487 = vmatprep.subr.mxu0 %v211
        %488 = vmatpush1.msra.mxu0 %v210
        %489 = vmatprep.subr.mxu0 %v209
        %490 = vmatpush1.msra.mxu0 %v208
        %491 = vmatprep.subr.mxu0 %v207
        %492 = vmatpush1.msra.mxu0 %v206
        %493 = vmatprep.subr.mxu0 %v205
        %494 = vmatpush1.msra.mxu0 %v204
        %495 = vmatprep.subr.mxu0 %v267
        %496 = vmatpush2.msra.mxu0 %v266
        %497 = vmatprep.subr.mxu0 %v265
        %498 = vmatpush2.msra.mxu0 %v264
        %499 = vmatprep.subr.mxu0 %v263
        %500 = vmatpush2.msra.mxu0 %v262
        %501 = vmatprep.subr.mxu0 %v261
        %502 = vmatpush2.msra.mxu0 %v260
        %503 = vmatprep.subr.mxu0 %v259
        %504 = vmatpush2.msra.mxu0 %v258
        %505 = vmatprep.subr.mxu0 %v257
        %506 = vmatpush2.msra.mxu0 %v256
        %507 = vmatprep.subr.mxu0 %v255
        %508 = vmatpush2.msra.mxu0 %v254
        %509 = vmatprep.subr.mxu0 %v253
        %510 = vmatpush2.msra.mxu0 %v252
        %511 = vmatprep.subr.mxu0 %v251
        %512 = vmatpush2.msra.mxu0 %v250
        %513 = vmatprep.subr.mxu0 %v249
        %514 = vmatpush2.msra.mxu0 %v248
        %515 = vmatprep.subr.mxu0 %v247
        %516 = vmatpush2.msra.mxu0 %v246
        %517 = vmatprep.subr.mxu0 %v245
        %518 = vmatpush2.msra.mxu0 %v244
        %519 = vmatprep.subr.mxu0 %v243
        %520 = vmatpush2.msra.mxu0 %v242
        %521 = vmatprep.subr.mxu0 %v241
        %522 = vmatpush2.msra.mxu0 %v240
        %523 = vmatprep.subr.mxu0 %v239
        %524 = vmatpush2.msra.mxu0 %v238
        %525 = vmatprep.subr.mxu0 %v237
        %526 = vmatpush2.msra.mxu0 %v236
        %527 = vmatprep.mubr.f32.mxu0 %v461
        %528 = vmatmul.mubr.f32.gmra.mxu0 %v460
        %v529 = vpop.f32.mrf.mxu0
        %v530 = vadd.f32 %v308, %v529
        %v531 = vpop.f32.mrf.mxu0
        %v532 = vadd.f32 %v312, %v531
        %533 = vdwg.mxu0
        %534 = vmatprep.subr.mxu0 %v299
        %535 = vmatpush1.msra.mxu0 %v298
        %536 = vmatprep.subr.mxu0 %v297
        %537 = vmatpush1.msra.mxu0 %v296
        %538 = vmatprep.subr.mxu0 %v295
        %539 = vmatpush1.msra.mxu0 %v294
        %540 = vmatprep.subr.mxu0 %v293
        %541 = vmatpush1.msra.mxu0 %v292
        %542 = vmatprep.subr.mxu0 %v291
        %543 = vmatpush1.msra.mxu0 %v290
        %544 = vmatprep.subr.mxu0 %v289
        %545 = vmatpush1.msra.mxu0 %v288
        %546 = vmatprep.subr.mxu0 %v287
        %547 = vmatpush1.msra.mxu0 %v286
        %548 = vmatprep.subr.mxu0 %v285
        %549 = vmatpush1.msra.mxu0 %v284
        %550 = vmatprep.subr.mxu0 %v283
        %551 = vmatpush1.msra.mxu0 %v282
        %552 = vmatprep.subr.mxu0 %v281
        %553 = vmatpush1.msra.mxu0 %v280
        %554 = vmatprep.subr.mxu0 %v279
        %555 = vmatpush1.msra.mxu0 %v278
        %556 = vmatprep.subr.mxu0 %v277
        %557 = vmatpush1.msra.mxu0 %v276
        %558 = vmatprep.subr.mxu0 %v275
        %559 = vmatpush1.msra.mxu0 %v274
        %560 = vmatprep.subr.mxu0 %v273
        %561 = vmatpush1.msra.mxu0 %v272
        %562 = vmatprep.subr.mxu0 %v271
        %563 = vmatpush1.msra.mxu0 %v270
        %564 = vmatprep.subr.mxu0 %v269
        %565 = vmatpush1.msra.mxu0 %v268
        %566 = vmatprep.subr.mxu0 0.0
        %567 = vmatpush2.msra.mxu0 0.0
        %568 = vmatprep.subr.mxu0 0.0
        %569 = vmatpush2.msra.mxu0 0.0
        %570 = vmatprep.subr.mxu0 0.0
        %571 = vmatpush2.msra.mxu0 0.0
        %572 = vmatprep.subr.mxu0 0.0
        %573 = vmatpush2.msra.mxu0 0.0
        %574 = vmatprep.subr.mxu0 0.0
        %575 = vmatpush2.msra.mxu0 0.0
        %576 = vmatprep.subr.mxu0 0.0
        %577 = vmatpush2.msra.mxu0 0.0
        %578 = vmatprep.subr.mxu0 0.0
        %579 = vmatpush2.msra.mxu0 0.0
        %580 = vmatprep.subr.mxu0 0.0
        %581 = vmatpush2.msra.mxu0 0.0
        %582 = vmatprep.subr.mxu0 0.0
        %583 = vmatpush2.msra.mxu0 0.0
        %584 = vmatprep.subr.mxu0 0.0
        %585 = vmatpush2.msra.mxu0 0.0
        %586 = vmatprep.subr.mxu0 0.0
        %587 = vmatpush2.msra.mxu0 0.0
        %588 = vmatprep.subr.mxu0 0.0
        %589 = vmatpush2.msra.mxu0 0.0
        %590 = vmatprep.subr.mxu0 0.0
        %591 = vmatpush2.msra.mxu0 0.0
        %592 = vmatprep.subr.mxu0 0.0
        %593 = vmatpush2.msra.mxu0 0.0
        %594 = vmatprep.subr.mxu0 0.0
        %595 = vmatpush2.msra.mxu0 0.0
        %596 = vmatprep.subr.mxu0 0.0
        %597 = vmatpush2.msra.mxu0 0.0
        %598 = vmatprep.mubr.f32.mxu0 0.0
        %599 = vmatmul.mubr.f32.gmra.mxu0 %v462
        %v600 = vpop.f32.mrf.mxu0
        %v601 = vadd.f32 %v530, %v600
        %v602 = vpop.f32.mrf.mxu0
        %v603 = vadd.f32 %v532, %v602
        %604 = vdwg.mxu0
        %605 = vst [vmem:[%s203 + $0x10] sm:$0xff] %v601
        %606 = vst [vmem:[%s203 + $0x18] sm:$0xff] %v603
        %s607 = sand.u32 %s97, 1
        %s608 = scalar_lea.sflag [#allocation4], %s607
        %s609 = sand.u32 %s97, 1
        %s610 = smul.addr %s609, 32
        %s611 = scalar_lea.vmem [#allocation7], %s610
        // Predicated region
        $region41: #{tpu_custom_call.1} parent=31 // pred_check
          %p612 = pneg %p107
        $region42: #{tpu_custom_call.1} parent=31 // pred_check_branch
          %614 = sbr.rel (%p612) target = $region44
        $region43: #{tpu_custom_call.1} parent=31 // pred_region
          %s616 = ssub.s32 512, 512
          %617 = vsyncadd %s608, %s616
          %s618 = smul.addr %s21, 4
          %s619 = smul.addr %s618, 128
          %s620 = scalar_lea.hbm %s3, %s619
          %s622 = sshll.u32 %s611, 4
          %s623 = int_to_ptr.vmem [resolvable:$true] %s622
          %625 = dma.vmem_to_hbm [thread:$0]  %s623, 512, %s620, %s608
        $region44: #{tpu_custom_call.1} parent=31 // pred_fallthru
          _
      $region32: #{tpu_custom_call.1} parent=5 // pred_fallthru
        _
      %p626 = scmp.le.s32.totalorder 2, %s16
      // Predicated region
      $region45: #{tpu_custom_call.1} parent=5 // pred_check
        %p627 = pneg %p626
      $region46: #{tpu_custom_call.1} parent=5 // pred_check_branch
        %629 = sbr.rel (%p627) target = $region48
      $region47: #{tpu_custom_call.1} parent=5 // pred_region
        %s630 = ssub.s32 %s16, 2
        // Predicated region
        $region49: #{tpu_custom_call.1} parent=47 // pred_check
          %p631 = pneg %p113
        $region50: #{tpu_custom_call.1} parent=47 // pred_check_branch
          %633 = sbr.rel (%p631) target = $region52
        $region51: #{tpu_custom_call.1} parent=47 // pred_region
          %s634 = sand.u32 %s98, 1
          %s635 = scalar_lea.sflag [#allocation4], %s634
          %s636 = sand.u32 %s98, 1
          %s637 = smul.addr %s636, 32
          %s638 = scalar_lea.vmem [#allocation7], %s637
          %639 = dma.done %s635, 512
        $region52: #{tpu_custom_call.1} parent=47 // pred_fallthru
          _
      $region48: #{tpu_custom_call.1} parent=5 // pred_fallthru
        _
    $region6: #{tpu_custom_call.1} parent=1 // loop_footer
      %s20 = sadd.s32 1, %s16
    $region7: #{tpu_custom_call.1} parent=1 // loop_footer_branch
      %15 = sbr.rel target = $region3
    $region8: #{tpu_custom_call.1} parent=1 // loop_exit
      _
    %640 = vsyncpa [#allocation3], 1
    %s641 = scalar_lea.sflag [#allocation3], 1
    %642 = vsyncpa %s641, 1
    %643 = vsyncpa [#allocation6], 1
    %644 = vsyncpa [#allocation4], 1
    %s645 = scalar_lea.sflag [#allocation4], 1
    %646 = vsyncpa %s645, 1

</llo_original>
